<compile_context>
chip_gen: v5e
topology: v5e:2x2
jax: 0.10.0
libtpu: 0.0.40
codegen_flags: <defaults>
</compile_context>

<pallas_src>
import jax
import jax.numpy as jnp
from jax.experimental import pallas as pl
from jax.experimental.pallas import tpu as pltpu


def _copy_kernel(x_ref, o_ref):
    # Pure lane-dense copy of a (N, TILE) tile.  No reshape, no relayout.
    o_ref[...] = x_ref[...]


def _pick_feature_tile(n: int, f: int, itemsize: int) -> int:
    """Largest multiple-of-128 tile that divides f and fits the VMEM budget.

    Budget accounts for double-buffered input + output tiles (4x live copies)
    and stays under the smallest default scoped-VMEM limit (v5e: 16 MiB).
    """
    if f % 128 != 0:
        # Full-extent block is always legal (block dim == array dim), and
        # avoids a ragged, masked-store remainder tile.
        return f
    budget_bytes = 8 * 1024 * 1024          # 4 live tiles must fit in this
    max_by_vmem = budget_bytes // (4 * n * itemsize)
    cap = max(128, min(f, 8192, (max_by_vmem // 128) * 128))
    t = cap
    while t >= 128:
        if f % t == 0:
            return t
        t -= 128
    return f


def flatten(x: jax.Array) -> jax.Array:
    """Pallas equivalent of `x.view(x.size(0), -1)`."""
    n = x.shape[0]
    f = 1
    for d in x.shape[1:]:
        f *= d

    # Metadata-only collapse (contiguous row-major == torch .view(N, -1)).
    x2 = jnp.reshape(x, (n, f))

    tile = _pick_feature_tile(n, f, jnp.dtype(x.dtype).itemsize)
    grid = (f // tile,)

    return pl.pallas_call(
        _copy_kernel,
        out_shape=jax.ShapeDtypeStruct((n, f), x.dtype),
        grid=grid,
        in_specs=[pl.BlockSpec((n, tile), lambda j: (0, j))],
        out_specs=pl.BlockSpec((n, tile), lambda j: (0, j)),
        compiler_params=pltpu.CompilerParams(
            # Single independent axis -> shard across TCs on v7x (megacore).
            dimension_semantics=("parallel",),
        ),
    )(x2)


if __name__ == "__main__":
    key = jax.random.PRNGKey(0)
    # Small NCHW input consistent with what Flatten sees inside YOLOv1.
    x = jax.random.normal(key, (2, 4, 16, 16), dtype=jnp.float32)

    y = flatten(x)
    y = jax.block_until_ready(y)

    # Reference: plain JAX reshape (identical semantics to torch .view(N, -1)).
    y_ref = x.reshape(x.shape[0], -1)

    assert y.shape == (2, 4 * 16 * 16), y.shape
    assert y.dtype == x.dtype
    assert bool(jnp.array_equal(y, y_ref)), "Pallas flatten mismatch vs reference"

    print("KERNEL_OK")
</pallas_src>

<mosaic_0001>
module attributes {stable_mosaic.version = 11 : i64} {
  func.func @_copy_kernel(%arg0: i32, %arg1: memref<2x1024xf32, #tpu.memory_space<vmem>>, %arg2: memref<2x1024xf32, #tpu.memory_space<vmem>>) attributes {dimension_semantics = [#tpu.dimension_semantics<parallel>], iteration_bounds = array<i64: 1>, scalar_prefetch = 0 : i64, scratch_operands = 0 : i64, tpu.core_type = #tpu.core_type<tc>, window_params = [{transform_indices = @transform_0, window_bounds = array<i64: 2, 1024>}, {transform_indices = @transform_1, window_bounds = array<i64: 2, 1024>}]} {
    %c0 = arith.constant 0 : index
    %c0_0 = arith.constant 0 : index
    %0 = vector.load %arg1[%c0, %c0_0] : memref<2x1024xf32, #tpu.memory_space<vmem>>, vector<2x1024xf32>
    %c0_1 = arith.constant 0 : index
    %c0_2 = arith.constant 0 : index
    %1 = vector.load %arg2[%c0_1, %c0_2] : memref<2x1024xf32, #tpu.memory_space<vmem>>, vector<2x1024xf32>
    tpu.vector_store %arg2[%c0_1, %c0_2], %0 {strides = array<i32>} : memref<2x1024xf32, #tpu.memory_space<vmem>>, vector<2x1024xf32>,
    return
  }
  func.func @transform_0(%arg0: i32) -> (i32, i32) {
    %c0_i32 = arith.constant 0 : i32
    %c0_i32_0 = arith.constant 0 : i32
    return %c0_i32, %arg0 : i32, i32
  }
  func.func @transform_1(%arg0: i32) -> (i32, i32) {
    %c0_i32 = arith.constant 0 : i32
    %c0_i32_0 = arith.constant 0 : i32
    return %c0_i32, %arg0 : i32, i32
  }
}

</mosaic_0001>

<llo_original>
// kernel: tpu_custom_call.1
$region0: #{tpu_custom_call.1}
  #allocation0 [shape = 'u32[]', space=smem, size = 0x4, offset = 0x4, fixed_abs, tag = 'smem constant byte address 0x4 - core index']
  #allocation1 [shape = 'u32[72,128]{1,0:T(1,128)}', space=vmem, size = 0x9000, scoped, tag = 'internal scratch']
  %s0 = inlined_call_operand.hbm [shape: f32[2,1024], index: 0, kind: input, shape index: {}]
  %s1 = inlined_call_operand.hbm [shape: f32[2,1024], index: 1, kind: output, shape index: {}]
  %s2 = sld [smem:[#allocation0]]
  $region18: #{tpu_custom_call.1} parent=0
    _
  %s4 = ssub.s32 1, %s2
  %s5 = scalar_select 0, %s4, %s2
  $region1: #{tpu_custom_call.1} parent=0
    #allocation2 [shape = 'u8[8192]{0}', space=vmem, size = 0x2000, scoped, tag = 'input window, operand 0, single buffered']
    #allocation3 [shape = 's32[1]{0}', space=sflag, size = 0x4, scoped, tag = 'scoped memory for tpu_custom_call.1']
    #allocation4 [shape = 's32[1]{0}', space=sflag, size = 0x4, scoped, tag = 'scoped memory for tpu_custom_call.1']
    #allocation5 [shape = 'u8[8192]{0}', space=vmem, size = 0x2000, scoped, tag = 'output window, operand 0, single buffered']
    %6 = vsyncpa [#allocation3], 0
    %7 = vsyncpa [#allocation4], 0
    // Predicated region
    $region2: #{tpu_custom_call.1} parent=1 // pred_check
      _
    $region3: #{tpu_custom_call.1} parent=1 // pred_check_branch
      %9 = sbr.rel (0) target = $region5
    $region4: #{tpu_custom_call.1} parent=1 // pred_region
      %11 = vsyncadd [#allocation3], 0
      %s13 = sshll.u32 %s0, 4
      %s14 = int_to_ptr.hbm [resolvable:$true] %s13
      %s15 = sshll.u32 [#allocation2], 4
      %s16 = int_to_ptr.vmem [resolvable:$true] %s15
      %18 = dma.hbm_to_vmem [thread:$0]  %s14, 256, %s16, [#allocation3]
    $region5: #{tpu_custom_call.1} parent=1 // pred_fallthru
      _
    // Predicated region
    $region6: #{tpu_custom_call.1} parent=1 // pred_check
      _
    $region7: #{tpu_custom_call.1} parent=1 // pred_check_branch
      %20 = sbr.rel (0) target = $region9
    $region8: #{tpu_custom_call.1} parent=1 // pred_region
      %22 = dma.done [#allocation3], 256
    $region9: #{tpu_custom_call.1} parent=1 // pred_fallthru
      _
    %v23 = vld [vmem:[#allocation2] sm:$0xff]
    %v24 = vld [vmem:[#allocation2 + $0x8] sm:$0xff]
    %25 = vst [vmem:[#allocation5] sm:$0xff] %v23
    %26 = vst [vmem:[#allocation5 + $0x8] sm:$0xff] %v24
    // Predicated region
    $region10: #{tpu_custom_call.1} parent=1 // pred_check
      _
    $region11: #{tpu_custom_call.1} parent=1 // pred_check_branch
      %28 = sbr.rel (0) target = $region13
    $region12: #{tpu_custom_call.1} parent=1 // pred_region
      %30 = vsyncadd [#allocation4], 0
      %s32 = sshll.u32 [#allocation5], 4
      %s33 = int_to_ptr.vmem [resolvable:$true] %s32
      %s34 = sshll.u32 %s1, 4
      %s35 = int_to_ptr.hbm [resolvable:$true] %s34
      %37 = dma.vmem_to_hbm [thread:$0]  %s33, 256, %s35, [#allocation4]
    $region13: #{tpu_custom_call.1} parent=1 // pred_fallthru
      _
    // Predicated region
    $region14: #{tpu_custom_call.1} parent=1 // pred_check
      _
    $region15: #{tpu_custom_call.1} parent=1 // pred_check_branch
      %39 = sbr.rel (0) target = $region17
    $region16: #{tpu_custom_call.1} parent=1 // pred_region
      %41 = dma.done [#allocation4], 256
    $region17: #{tpu_custom_call.1} parent=1 // pred_fallthru
      _
    %42 = vsyncpa [#allocation3], 1
    %43 = vsyncpa [#allocation4], 1

</llo_original>
